<compile_context>
chip_gen: v7x
topology: tpu7x:2x2x1
jax: 0.10.0
libtpu: 0.0.40
codegen_flags: <defaults>
</compile_context>

<pallas_src>
import functools

import jax
import jax.numpy as jnp
from jax import lax
from jax.experimental import pallas as pl
from jax.experimental.pallas import tpu as pltpu

_EPS = 1e-8  # torch.cosine_similarity default eps


def _direction_loss_kernel(d1_ref, d2_ref, o_ref, *, rows_per_tile,
                           tiles_per_group, hw, need_mask):
    g = pl.program_id(1)
    t = pl.program_id(2)

    @pl.when(t == 0)
    def _():
        o_ref[...] = jnp.zeros_like(o_ref)

    d1 = d1_ref[...].astype(jnp.float32)          # (C, R, 128)
    d2 = d2_ref[...].astype(jnp.float32)          # (C, R, 128)

    dot = jnp.sum(d1 * d2, axis=0)                # (R, 128) -- C-1 VPU adds
    s1 = jnp.sum(d1 * d1, axis=0)
    s2 = jnp.sum(d2 * d2, axis=0)
    cos = dot * lax.rsqrt(jnp.maximum(s1 * s2, jnp.float32(_EPS * _EPS)))

    if need_mask:                                 # static: only when tiles overhang H*W
        tile = g * tiles_per_group + t
        row = lax.broadcasted_iota(jnp.int32, cos.shape, 0)
        lane = lax.broadcasted_iota(jnp.int32, cos.shape, 1)
        pos = (tile * rows_per_tile + row) * 128 + lane
        cos = jnp.where(pos < hw, cos, 0.0)

    o_ref[...] += cos                             # per-lane partial sums (VPU only)


def direction_loss(dir1, dir2):
    """dir1, dir2: (B, C, H, W) arrays (NCHW, any float dtype). Returns scalar f32."""
    assert dir1.shape == dir2.shape
    B, C, H, W = dir1.shape
    hw = H * W
    n_valid = B * hw

    pad = (-hw) % 128
    rows = (hw + pad) // 128

    def prep(x):
        x = x.reshape(B, C, hw)                   # free, contiguous reshape
        if pad:
            # TODO(synk): ragged H*W (not a multiple of 128) costs one HBM pad copy.
            x = jnp.pad(x, ((0, 0), (0, 0), (0, pad)))
        return x.reshape(B, C, rows, 128)

    d1 = prep(dir1)
    d2 = prep(dir2)

    # ~1 MiB input blocks: big enough to amortize per-grid-step overhead (~0.35 us),
    # small enough that (2 inputs x 2 buffers) + resident output fit scoped VMEM.
    itemsize = jnp.dtype(d1.dtype).itemsize
    bytes_per_row = C * 128 * itemsize
    target_rows = max(8, (1 << 20) // bytes_per_row)
    if rows <= target_rows:
        tile_rows = rows                          # equals full dim -> always legal
    else:
        tile_rows = (target_rows // 8) * 8        # multiple of 8 sublanes
    num_tiles = -(-rows // tile_rows)
    need_mask = (tile_rows * num_tiles * 128 != hw)

    # Split the tile axis into (G parallel, T arbitrary) so both TensorCores on a
    # v7x megacore get work even when B == 1.  Only split when it divides evenly.
    if num_tiles % 2 == 0:
        n_groups = 2
    else:
        n_groups = 1
    tiles_per_group = num_tiles // n_groups

    partials = pl.pallas_call(
        functools.partial(
            _direction_loss_kernel,
            rows_per_tile=tile_rows,
            tiles_per_group=tiles_per_group,
            hw=hw,
            need_mask=need_mask,
        ),
        out_shape=jax.ShapeDtypeStruct((B, n_groups, tile_rows, 128), jnp.float32),
        grid_spec=pltpu.PrefetchScalarGridSpec(
            num_scalar_prefetch=0,
            grid=(B, n_groups, tiles_per_group),
            in_specs=[
                pl.BlockSpec((None, C, tile_rows, 128),
                             lambda b, g, t: (b, 0, g * tiles_per_group + t, 0)),
                pl.BlockSpec((None, C, tile_rows, 128),
                             lambda b, g, t: (b, 0, g * tiles_per_group + t, 0)),
            ],
            out_specs=pl.BlockSpec((None, None, tile_rows, 128),
                                   lambda b, g, t: (b, g, 0, 0)),
        ),
        compiler_params=pltpu.CompilerParams(
            dimension_semantics=("parallel", "parallel", "arbitrary"),
        ),
    )(d1, d2)

    # Tiny finalize over the (B, G, tile_rows, 128) partials array.
    return jnp.sum(partials) / jnp.float32(n_valid) + jnp.float32(1.0 / 1.1)


def _reference(dir1, dir2):
    # pure-JAX reference matching torch.cosine_similarity(dim=1) semantics
    d1 = dir1.astype(jnp.float32)
    d2 = dir2.astype(jnp.float32)
    dot = jnp.sum(d1 * d2, axis=1)
    s1 = jnp.sum(d1 * d1, axis=1)
    s2 = jnp.sum(d2 * d2, axis=1)
    cos = dot / jnp.sqrt(jnp.maximum(s1 * s2, _EPS * _EPS))
    return jnp.mean(1.0 / 1.1 + cos)


if __name__ == "__main__":
    key = jax.random.PRNGKey(0)
    k1, k2, k3, k4 = jax.random.split(key, 4)

    # Main test: small NCHW shapes consistent with the module.
    B, C, H, W = 2, 4, 16, 16
    dir1 = jax.random.normal(k1, (B, C, H, W), dtype=jnp.float32)
    dir2 = jax.random.normal(k2, (B, C, H, W), dtype=jnp.float32)

    loss = direction_loss(dir1, dir2)
    loss = jax.block_until_ready(loss)
    ref = _reference(dir1, dir2)
    assert jnp.allclose(loss, ref, atol=1e-5, rtol=1e-5), (loss, ref)

    # Ragged spatial size (H*W not a multiple of 128) exercises the mask/pad path.
    B2, C2, H2, W2 = 2, 3, 5, 5
    e1 = jax.random.normal(k3, (B2, C2, H2, W2), dtype=jnp.float32)
    e2 = jax.random.normal(k4, (B2, C2, H2, W2), dtype=jnp.float32)
    loss2 = jax.block_until_ready(direction_loss(e1, e2))
    ref2 = _reference(e1, e2)
    assert jnp.allclose(loss2, ref2, atol=1e-5, rtol=1e-5), (loss2, ref2)

    print("KERNEL_OK")
</pallas_src>

<mosaic_0001>
module attributes {stable_mosaic.version = 11 : i64} {
  func.func @_direction_loss_kernel(%arg0: i32, %arg1: i32, %arg2: i32, %arg3: memref<1x4x2x128xf32, #tpu.memory_space<vmem>>, %arg4: memref<1x4x2x128xf32, #tpu.memory_space<vmem>>, %arg5: memref<1x1x2x128xf32, #tpu.memory_space<vmem>>) attributes {dimension_semantics = [#tpu.dimension_semantics<parallel>, #tpu.dimension_semantics<parallel>, #tpu.dimension_semantics<arbitrary>], iteration_bounds = array<i64: 2, 1, 1>, scalar_prefetch = 0 : i64, scratch_operands = 0 : i64, tpu.core_type = #tpu.core_type<tc>, window_params = [{transform_indices = @transform_0, window_bounds = array<i64: 1, 4, 2, 128>}, {transform_indices = @transform_1, window_bounds = array<i64: 1, 4, 2, 128>}, {transform_indices = @transform_2, window_bounds = array<i64: 1, 1, 2, 128>}]} {
    %c0_i32 = arith.constant 0 : i32
    %0 = arith.cmpi eq, %arg2, %c0_i32 : i32
    %1 = arith.extui %0 : i1 to i32
    %c0_i32_0 = arith.constant 0 : i32
    %2 = arith.cmpi ne, %1, %c0_i32_0 : i32
    scf.if %2 {
      %cst_19 = arith.constant 0.000000e+00 : f32
      %24 = vector.broadcast %cst_19 : f32 to vector<2x128xf32>
      %c0_20 = arith.constant 0 : index
      %c0_21 = arith.constant 0 : index
      %c0_22 = arith.constant 0 : index
      %c0_23 = arith.constant 0 : index
      %25 = vector.load %arg5[%c0_20, %c0_21, %c0_22, %c0_23] : memref<1x1x2x128xf32, #tpu.memory_space<vmem>>, vector<1x1x2x128xf32>
      %26 = vector.shape_cast %25 : vector<1x1x2x128xf32> to vector<2x128xf32>
      %27 = vector.shape_cast %24 : vector<2x128xf32> to vector<1x1x2x128xf32>
      tpu.vector_store %arg5[%c0_20, %c0_21, %c0_22, %c0_23], %27 {strides = array<i32>} : memref<1x1x2x128xf32, #tpu.memory_space<vmem>>, vector<1x1x2x128xf32>,
    } else {
    }
    %c0 = arith.constant 0 : index
    %c0_1 = arith.constant 0 : index
    %c0_2 = arith.constant 0 : index
    %c0_3 = arith.constant 0 : index
    %3 = vector.load %arg3[%c0, %c0_1, %c0_2, %c0_3] : memref<1x4x2x128xf32, #tpu.memory_space<vmem>>, vector<1x4x2x128xf32>
    %4 = vector.shape_cast %3 : vector<1x4x2x128xf32> to vector<4x2x128xf32>
    %c0_4 = arith.constant 0 : index
    %c0_5 = arith.constant 0 : index
    %c0_6 = arith.constant 0 : index
    %c0_7 = arith.constant 0 : index
    %5 = vector.load %arg4[%c0_4, %c0_5, %c0_6, %c0_7] : memref<1x4x2x128xf32, #tpu.memory_space<vmem>>, vector<1x4x2x128xf32>
    %6 = vector.shape_cast %5 : vector<1x4x2x128xf32> to vector<4x2x128xf32>
    %7 = arith.mulf %4, %6 : vector<4x2x128xf32>
    %cst = arith.constant dense<0.000000e+00> : vector<2x128xf32>
    %8 = vector.multi_reduction <add>, %7, %cst [0] : vector<4x2x128xf32> to vector<2x128xf32>
    %9 = arith.mulf %4, %4 : vector<4x2x128xf32>
    %cst_8 = arith.constant dense<0.000000e+00> : vector<2x128xf32>
    %10 = vector.multi_reduction <add>, %9, %cst_8 [0] : vector<4x2x128xf32> to vector<2x128xf32>
    %11 = arith.mulf %6, %6 : vector<4x2x128xf32>
    %cst_9 = arith.constant dense<0.000000e+00> : vector<2x128xf32>
    %12 = vector.multi_reduction <add>, %11, %cst_9 [0] : vector<4x2x128xf32> to vector<2x128xf32>
    %13 = arith.mulf %10, %12 : vector<2x128xf32>
    %cst_10 = arith.constant 1.000000e-16 : f32
    %14 = vector.broadcast %cst_10 : f32 to vector<2x128xf32>
    %15 = arith.maximumf %13, %14 : vector<2x128xf32>
    %16 = math.rsqrt %15 : vector<2x128xf32>
    %17 = arith.mulf %8, %16 : vector<2x128xf32>
    %c0_11 = arith.constant 0 : index
    %c0_12 = arith.constant 0 : index
    %c0_13 = arith.constant 0 : index
    %c0_14 = arith.constant 0 : index
    %18 = vector.load %arg5[%c0_11, %c0_12, %c0_13, %c0_14] : memref<1x1x2x128xf32, #tpu.memory_space<vmem>>, vector<1x1x2x128xf32>
    %19 = vector.shape_cast %18 : vector<1x1x2x128xf32> to vector<2x128xf32>
    %20 = arith.addf %19, %17 : vector<2x128xf32>
    %c0_15 = arith.constant 0 : index
    %c0_16 = arith.constant 0 : index
    %c0_17 = arith.constant 0 : index
    %c0_18 = arith.constant 0 : index
    %21 = vector.load %arg5[%c0_15, %c0_16, %c0_17, %c0_18] : memref<1x1x2x128xf32, #tpu.memory_space<vmem>>, vector<1x1x2x128xf32>
    %22 = vector.shape_cast %21 : vector<1x1x2x128xf32> to vector<2x128xf32>
    %23 = vector.shape_cast %20 : vector<2x128xf32> to vector<1x1x2x128xf32>
    tpu.vector_store %arg5[%c0_15, %c0_16, %c0_17, %c0_18], %23 {strides = array<i32>} : memref<1x1x2x128xf32, #tpu.memory_space<vmem>>, vector<1x1x2x128xf32>,
    return
  }
  func.func @transform_0(%arg0: i32, %arg1: i32, %arg2: i32) -> (i32, i32, i32, i32) {
    %c1_i32 = arith.constant 1 : i32
    %0 = arith.muli %arg1, %c1_i32 : i32
    %1 = arith.addi %0, %arg2 : i32
    %c0_i32 = arith.constant 0 : i32
    %c0_i32_0 = arith.constant 0 : i32
    %c0_i32_1 = arith.constant 0 : i32
    return %arg0, %c0_i32, %1, %c0_i32_0 : i32, i32, i32, i32
  }
  func.func @transform_1(%arg0: i32, %arg1: i32, %arg2: i32) -> (i32, i32, i32, i32) {
    %c1_i32 = arith.constant 1 : i32
    %0 = arith.muli %arg1, %c1_i32 : i32
    %1 = arith.addi %0, %arg2 : i32
    %c0_i32 = arith.constant 0 : i32
    %c0_i32_0 = arith.constant 0 : i32
    %c0_i32_1 = arith.constant 0 : i32
    return %arg0, %c0_i32, %1, %c0_i32_0 : i32, i32, i32, i32
  }
  func.func @transform_2(%arg0: i32, %arg1: i32, %arg2: i32) -> (i32, i32, i32, i32) {
    %c0_i32 = arith.constant 0 : i32
    %c0_i32_0 = arith.constant 0 : i32
    %c0_i32_1 = arith.constant 0 : i32
    return %arg0, %arg1, %c0_i32, %c0_i32_0 : i32, i32, i32, i32
  }
}

</mosaic_0001>

<llo_original>
// kernel: tpu_custom_call.1
$region0: #{tpu_custom_call.1}
  #allocation0 [shape = 'u32[]', space=smem, size = 0x4, offset = 0x4, fixed_abs, tag = 'smem constant byte address 0x4 - core index']
  #allocation1 [shape = 'u32[144,128]{1,0:T(1,128)}', space=vmem, size = 0x12000, scoped, tag = 'internal scratch']
  %s0 = inlined_call_operand.hbm [shape: f32[2,4,2,128], index: 0, kind: input, shape index: {}]
  %s1 = inlined_call_operand.hbm [shape: f32[2,4,2,128], index: 1, kind: input, shape index: {}]
  %s2 = inlined_call_operand.hbm [shape: f32[2,1,2,128], index: 2, kind: output, shape index: {}]
  %s3 = sld [smem:[#allocation0]]
  $region53: #{tpu_custom_call.1} parent=0
    _
  %s5 = ssub.s32 1, %s3
  %s6 = scalar_select 0, %s5, %s3
  $region1: #{tpu_custom_call.1} parent=0
    #allocation2 [shape = 'u8[8192]{0}', space=vmem, size = 0x2000, scoped, tag = 'input window, operand 0']
    #allocation3 [shape = 's32[2]{0}', space=sflag, size = 0x8, scoped, tag = 'scoped memory for tpu_custom_call.1']
    #allocation4 [shape = 's32[2]{0}', space=sflag, size = 0x8, scoped, tag = 'scoped memory for tpu_custom_call.1']
    #allocation5 [shape = 'u8[8192]{0}', space=vmem, size = 0x2000, scoped, tag = 'input window, operand 1']
    #allocation6 [shape = 's32[2]{0}', space=sflag, size = 0x8, scoped, tag = 'scoped memory for tpu_custom_call.1']
    #allocation7 [shape = 'u8[2048]{0}', space=vmem, size = 0x800, scoped, tag = 'output window, operand 0']
    %7 = vsyncpa [#allocation3], 0
    %s8 = scalar_lea.sflag [#allocation3], 1
    %9 = vsyncpa %s8, 0
    %10 = vsyncpa [#allocation6], 0
    %s11 = scalar_lea.sflag [#allocation6], 1
    %12 = vsyncpa %s11, 0
    %13 = vsyncpa [#allocation4], 0
    %s14 = scalar_lea.sflag [#allocation4], 1
    %15 = vsyncpa %s14, 0
    loop: start=0, step=1, limit=4
    $region2: #{tpu_custom_call.1} parent=1 // loop_pre_header
      _
    $region3: #{tpu_custom_call.1} parent=1 // loop_header
      %s17 = sphi 0, %s21
      %p18 = scmp.ge.s32.totalorder %s17, 4
      %s24 = sphi 0, %s43
      %s25 = sphi 0, %s39
      %s26 = sphi 0, %s35
      %s27 = sphi 0, %s24
      %s28 = sphi 0, %s25
      %s29 = sphi 0, %s26
      %s30 = sphi 0, %s27
      %s31 = sphi 0, %s28
      %s32 = sphi 0, %s29
      %s50 = sphi 0, %s52
      %s53 = sphi 0, %s50
      %s54 = sphi 0, %s53
      %s70 = sphi 0, %s54
      %s80 = sphi 0, %s82
      %s83 = sphi 0, %s80
      %s84 = sphi 0, %s83
      %s100 = sphi 0, %s84
      %s108 = sphi 0, %s110
      %s111 = sphi 0, %s108
      %s112 = sphi 0, %s111
      %s128 = sphi 0, %s112
    $region4: #{tpu_custom_call.1} parent=1 // loop_header_branch
      %20 = sbr.rel (%p18) target = $region8
    $region5: #{tpu_custom_call.1} parent=1 // loop_body
      %s22 = ssub.s32 %s17, 1
      %s23 = ssub.s32 %s17, 2
      %s33 = sadd.s32 1, %s26
      %p34 = scmp.ge.s32.totalorder %s33, 1
      %s35 = scalar_select %p34, 0, %s33
      %s36 = sadd.s32 1, %s25
      %s37 = scalar_select %p34, %s36, %s25
      %p38 = scmp.ge.s32.totalorder %s37, 1
      %s39 = scalar_select %p38, 0, %s37
      %s40 = sadd.s32 1, %s24
      %s41 = scalar_select %p38, %s40, %s24
      %p42 = scmp.ge.s32.totalorder %s41, 2
      %s43 = scalar_select %p42, 0, %s41
      %s44 = sadd.s32 %s25, %s26
      %s45 = sadd.s32 %s39, %s35
      %s46 = ssub.s32 %s24, %s43
      %s47 = ssub.s32 %s44, %s45
      %s48 = sor.u32 %s46, %s47
      %p49 = scmp.eq.s32.totalorder %s48, 0
      %s51 = sadd.s32 %s50, 1
      %s52 = scalar_select %p49, %s50, %s51
      %p55 = pneg %p49
      %p56 = scmp.eq.s32.totalorder %s17, 1
      %p57 = por %p55, %p56
      %p58 = scmp.ne.s32.totalorder %s50, %s53
      %p59 = scmp.eq.s32.totalorder %s17, 0
      %p60 = por %p58, %p59
      %p61 = scmp.ne.s32.totalorder %s50, %s53
      %p62 = scmp.eq.s32.totalorder %s22, 1
      %p63 = por %p61, %p62
      %p64 = scmp.ne.s32.totalorder %s53, %s54
      %p65 = scmp.eq.s32.totalorder %s22, 0
      %p66 = por %p64, %p65
      %p67 = scmp.ne.s32.totalorder %s53, %s54
      %p68 = scmp.eq.s32.totalorder %s23, 1
      %p69 = por %p67, %p68
      %p71 = scmp.ne.s32.totalorder %s54, %s70
      %p72 = scmp.eq.s32.totalorder %s23, 0
      %p73 = por %p71, %p72
      %s74 = sadd.s32 %s25, %s26
      %s75 = sadd.s32 %s39, %s35
      %s76 = ssub.s32 %s24, %s43
      %s77 = ssub.s32 %s74, %s75
      %s78 = sor.u32 %s76, %s77
      %p79 = scmp.eq.s32.totalorder %s78, 0
      %s81 = sadd.s32 %s80, 1
      %s82 = scalar_select %p79, %s80, %s81
      %p85 = pneg %p79
      %p86 = scmp.eq.s32.totalorder %s17, 1
      %p87 = por %p85, %p86
      %p88 = scmp.ne.s32.totalorder %s80, %s83
      %p89 = scmp.eq.s32.totalorder %s17, 0
      %p90 = por %p88, %p89
      %p91 = scmp.ne.s32.totalorder %s80, %s83
      %p92 = scmp.eq.s32.totalorder %s22, 1
      %p93 = por %p91, %p92
      %p94 = scmp.ne.s32.totalorder %s83, %s84
      %p95 = scmp.eq.s32.totalorder %s22, 0
      %p96 = por %p94, %p95
      %p97 = scmp.ne.s32.totalorder %s83, %s84
      %p98 = scmp.eq.s32.totalorder %s23, 1
      %p99 = por %p97, %p98
      %p101 = scmp.ne.s32.totalorder %s84, %s100
      %p102 = scmp.eq.s32.totalorder %s23, 0
      %p103 = por %p101, %p102
      %s104 = ssub.s32 %s24, %s43
      %s105 = ssub.s32 %s25, %s39
      %s106 = sor.u32 %s104, %s105
      %p107 = scmp.eq.s32.totalorder %s106, 0
      %s109 = sadd.s32 %s108, 1
      %s110 = scalar_select %p107, %s108, %s109
      %p113 = pneg %p107
      %p114 = scmp.eq.s32.totalorder %s17, 1
      %p115 = por %p113, %p114
      %p116 = scmp.ne.s32.totalorder %s108, %s111
      %p117 = scmp.eq.s32.totalorder %s17, 0
      %p118 = por %p116, %p117
      %p119 = scmp.ne.s32.totalorder %s108, %s111
      %p120 = scmp.eq.s32.totalorder %s22, 1
      %p121 = por %p119, %p120
      %p122 = scmp.ne.s32.totalorder %s111, %s112
      %p123 = scmp.eq.s32.totalorder %s22, 0
      %p124 = por %p122, %p123
      %p125 = scmp.ne.s32.totalorder %s111, %s112
      %p126 = scmp.eq.s32.totalorder %s23, 1
      %p127 = por %p125, %p126
      %p129 = scmp.ne.s32.totalorder %s112, %s128
      %p130 = scmp.eq.s32.totalorder %s23, 0
      %p131 = por %p129, %p130
      %p132 = scmp.le.s32.totalorder 1, %s17
      %p133 = scmp.lt.s32.totalorder %s17, 3
      %p134 = pnand %p132, %p133
      %p135 = pneg %p134
      // Predicated region
      $region9: #{tpu_custom_call.1} parent=5 // pred_check
        _
      $region10: #{tpu_custom_call.1} parent=5 // pred_check_branch
        %137 = sbr.rel (%p134) target = $region12
      $region11: #{tpu_custom_call.1} parent=5 // pred_region
        %s138 = ssub.s32 %s17, 1
      $region12: #{tpu_custom_call.1} parent=5 // pred_fallthru
        _
      %p139 = scmp.lt.s32.totalorder %s17, 2
      // Predicated region
      $region13: #{tpu_custom_call.1} parent=5 // pred_check
        %p140 = pneg %p139
      $region14: #{tpu_custom_call.1} parent=5 // pred_check_branch
        %142 = sbr.rel (%p140) target = $region16
      $region15: #{tpu_custom_call.1} parent=5 // pred_region
        // Predicated region
        $region17: #{tpu_custom_call.1} parent=15 // pred_check
          %p143 = pneg %p60
        $region18: #{tpu_custom_call.1} parent=15 // pred_check_branch
          %145 = sbr.rel (%p143) target = $region20
        $region19: #{tpu_custom_call.1} parent=15 // pred_region
          %s146 = sand.u32 %s50, 1
          %s147 = scalar_lea.sflag [#allocation3], %s146
          %s148 = sand.u32 %s50, 1
          %s149 = smul.addr %s148, 8
          %s150 = scalar_lea.vmem [#allocation2], %s149
          %s151 = sadd.s32 %s25, %s26
          %s153 = ssub.s32 128, 128
          %154 = vsyncadd %s147, %s153
          %s155 = smul.addr %s24, 4
          %s156 = sadd.s32 %s151, %s155
          %s157 = smul.addr %s156, 32
          %s158 = scalar_lea.hbm %s0, %s157
          %s159 = sshll.u32 %s150, 4
          %s160 = int_to_ptr.vmem [resolvable:$true] %s159
          %165 = dma.hbm_to_vmem [thread:$0]  %s158, 128, %s160, %s147, 32, 32, 2
        $region20: #{tpu_custom_call.1} parent=15 // pred_fallthru
          _
        // Predicated region
        $region21: #{tpu_custom_call.1} parent=15 // pred_check
          %p166 = pneg %p90
        $region22: #{tpu_custom_call.1} parent=15 // pred_check_branch
          %168 = sbr.rel (%p166) target = $region24
        $region23: #{tpu_custom_call.1} parent=15 // pred_region
          %s169 = sand.u32 %s80, 1
          %s170 = scalar_lea.sflag [#allocation6], %s169
          %s171 = sand.u32 %s80, 1
          %s172 = smul.addr %s171, 8
          %s173 = scalar_lea.vmem [#allocation5], %s172
          %s174 = sadd.s32 %s25, %s26
          %s176 = ssub.s32 128, 128
          %177 = vsyncadd %s170, %s176
          %s178 = smul.addr %s24, 4
          %s179 = sadd.s32 %s174, %s178
          %s180 = smul.addr %s179, 32
          %s181 = scalar_lea.hbm %s1, %s180
          %s182 = sshll.u32 %s173, 4
          %s183 = int_to_ptr.vmem [resolvable:$true] %s182
          %188 = dma.hbm_to_vmem [thread:$0]  %s181, 128, %s183, %s170, 32, 32, 2
        $region24: #{tpu_custom_call.1} parent=15 // pred_fallthru
          _
      $region16: #{tpu_custom_call.1} parent=5 // pred_fallthru
        _
      %p189 = scmp.le.s32.totalorder 1, %s17
      %p190 = scmp.lt.s32.totalorder %s17, 3
      %p191 = pnand %p189, %p190
      %p192 = pneg %p191
      // Predicated region
      $region25: #{tpu_custom_call.1} parent=5 // pred_check
        _
      $region26: #{tpu_custom_call.1} parent=5 // pred_check_branch
        %194 = sbr.rel (%p191) target = $region28
      $region27: #{tpu_custom_call.1} parent=5 // pred_region
        %s195 = ssub.s32 %s17, 1
        %s196 = sand.u32 %s53, 1
        %s197 = scalar_lea.sflag [#allocation3], %s196
        %s198 = sand.u32 %s53, 1
        %s199 = smul.addr %s198, 8
        %s200 = scalar_lea.vmem [#allocation2], %s199
        // Predicated region
        $region29: #{tpu_custom_call.1} parent=27 // pred_check
          %p201 = pneg %p66
        $region30: #{tpu_custom_call.1} parent=27 // pred_check_branch
          %203 = sbr.rel (%p201) target = $region32
        $region31: #{tpu_custom_call.1} parent=27 // pred_region
          %204 = dma.done %s197, 128
        $region32: #{tpu_custom_call.1} parent=27 // pred_fallthru
          _
        %s205 = sand.u32 %s83, 1
        %s206 = scalar_lea.sflag [#allocation6], %s205
        %s207 = sand.u32 %s83, 1
        %s208 = smul.addr %s207, 8
        %s209 = scalar_lea.vmem [#allocation5], %s208
        // Predicated region
        $region33: #{tpu_custom_call.1} parent=27 // pred_check
          %p210 = pneg %p96
        $region34: #{tpu_custom_call.1} parent=27 // pred_check_branch
          %212 = sbr.rel (%p210) target = $region36
        $region35: #{tpu_custom_call.1} parent=27 // pred_region
          %213 = dma.done %s206, 128
        $region36: #{tpu_custom_call.1} parent=27 // pred_fallthru
          _
        %s214 = sand.u32 %s53, 1
        %s215 = scalar_lea.sflag [#allocation3], %s214
        %s216 = sand.u32 %s53, 1
        %s217 = smul.addr %s216, 8
        %s218 = scalar_lea.vmem [#allocation2], %s217
        %p219 = pneg %p66
        %p220 = pneg %p63
        %s221 = sand.u32 %s83, 1
        %s222 = scalar_lea.sflag [#allocation6], %s221
        %s223 = sand.u32 %s83, 1
        %s224 = smul.addr %s223, 8
        %s225 = scalar_lea.vmem [#allocation5], %s224
        %p226 = pneg %p96
        %p227 = pneg %p93
        %p228 = pneg %p124
        %p229 = pneg %p121
        %s230 = sand.u32 %s111, 1
        %s231 = scalar_lea.sflag [#allocation4], %s230
        %s232 = sand.u32 %s111, 1
        %s233 = smul.addr %s232, 2
        %s234 = scalar_lea.vmem [#allocation7], %s233
        %s235 = sadd.s32 %s28, %s29
        %s236 = sadd.s32 %s28, %s29
        %p237 = scmp.eq.s32.totalorder %s29, 0
        // Predicated region
        $region37: #{tpu_custom_call.1} parent=27 // pred_check
          %p238 = pneg %p237
        $region38: #{tpu_custom_call.1} parent=27 // pred_check_branch
          %240 = sbr.rel (%p238) target = $region40
        $region39: #{tpu_custom_call.1} parent=27 // pred_region
          %241 = vst [vmem:[%s234] sm:$0x3] 0.0
        $region40: #{tpu_custom_call.1} parent=27 // pred_fallthru
          _
        %v242 = vld [vmem:[%s200] sm:$0x3]
        %v243 = vld [vmem:[%s200 + $0x2] sm:$0x3]
        %v244 = vld [vmem:[%s200 + $0x4] sm:$0x3]
        %v245 = vld [vmem:[%s200 + $0x6] sm:$0x3]
        %v246 = vld [vmem:[%s209] sm:$0x3]
        %v247 = vld [vmem:[%s209 + $0x2] sm:$0x3]
        %v248 = vld [vmem:[%s209 + $0x4] sm:$0x3]
        %v249 = vld [vmem:[%s209 + $0x6] sm:$0x3]
        %v250 = vmul.f32 %v242, %v246
        %v251 = vmul.f32 %v243, %v247
        %v252 = vmul.f32 %v244, %v248
        %v253 = vmul.f32 %v245, %v249
        %vm254 = vcmask 1041408
        %v255 = vsel %vm254, %v250, 0.0
        %v256 = vsel %vm254, %v251, 0.0
        %v257 = vadd.f32 %v255, %v256
        %v258 = vsel %vm254, %v252, 0.0
        %v259 = vadd.f32 %v257, %v258
        %v260 = vsel %vm254, %v253, 0.0
        %v261 = vadd.f32 %v259, %v260
        %v262 = vmul.f32 %v242, %v242
        %v263 = vmul.f32 %v243, %v243
        %v264 = vmul.f32 %v244, %v244
        %v265 = vmul.f32 %v245, %v245
        %v266 = vsel %vm254, %v262, 0.0
        %v267 = vsel %vm254, %v263, 0.0
        %v268 = vadd.f32 %v266, %v267
        %v269 = vsel %vm254, %v264, 0.0
        %v270 = vadd.f32 %v268, %v269
        %v271 = vsel %vm254, %v265, 0.0
        %v272 = vadd.f32 %v270, %v271
        %v273 = vmul.f32 %v246, %v246
        %v274 = vmul.f32 %v247, %v247
        %v275 = vmul.f32 %v248, %v248
        %v276 = vmul.f32 %v249, %v249
        %v277 = vsel %vm254, %v273, 0.0
        %v278 = vsel %vm254, %v274, 0.0
        %v279 = vadd.f32 %v277, %v278
        %v280 = vsel %vm254, %v275, 0.0
        %v281 = vadd.f32 %v279, %v280
        %v282 = vsel %vm254, %v276, 0.0
        %v283 = vadd.f32 %v281, %v282
        %v284 = vmul.f32 %v272, %v283
        %v285 = vmax.f32 %v284, 1e-16
        %v286 = vrsqrt.pop %v285
        %v287 = vmul.f32 %v261, %v286
        %v288 = vld [vmem:[%s234] sm:$0x3]
        %v289 = vadd.f32 %v288, %v287
        %290 = vst [vmem:[%s234] sm:$0x3] %v289
        %s291 = sand.u32 %s111, 1
        %s292 = scalar_lea.sflag [#allocation4], %s291
        %s293 = sand.u32 %s111, 1
        %s294 = smul.addr %s293, 2
        %s295 = scalar_lea.vmem [#allocation7], %s294
        // Predicated region
        $region41: #{tpu_custom_call.1} parent=27 // pred_check
          %p296 = pneg %p121
        $region42: #{tpu_custom_call.1} parent=27 // pred_check_branch
          %298 = sbr.rel (%p296) target = $region44
        $region43: #{tpu_custom_call.1} parent=27 // pred_region
          %s300 = ssub.s32 32, 32
          %301 = vsyncadd %s292, %s300
          %s302 = sadd.s32 %s28, %s27
          %s303 = smul.addr %s302, 32
          %s304 = scalar_lea.hbm %s2, %s303
          %s306 = sshll.u32 %s295, 4
          %s307 = int_to_ptr.vmem [resolvable:$true] %s306
          %309 = dma.vmem_to_hbm [thread:$0]  %s307, 32, %s304, %s292
        $region44: #{tpu_custom_call.1} parent=27 // pred_fallthru
          _
      $region28: #{tpu_custom_call.1} parent=5 // pred_fallthru
        _
      %p310 = scmp.le.s32.totalorder 2, %s17
      // Predicated region
      $region45: #{tpu_custom_call.1} parent=5 // pred_check
        %p311 = pneg %p310
      $region46: #{tpu_custom_call.1} parent=5 // pred_check_branch
        %313 = sbr.rel (%p311) target = $region48
      $region47: #{tpu_custom_call.1} parent=5 // pred_region
        %s314 = ssub.s32 %s17, 2
        // Predicated region
        $region49: #{tpu_custom_call.1} parent=47 // pred_check
          %p315 = pneg %p127
        $region50: #{tpu_custom_call.1} parent=47 // pred_check_branch
          %317 = sbr.rel (%p315) target = $region52
        $region51: #{tpu_custom_call.1} parent=47 // pred_region
          %s318 = sand.u32 %s112, 1
          %s319 = scalar_lea.sflag [#allocation4], %s318
          %s320 = sand.u32 %s112, 1
          %s321 = smul.addr %s320, 2
          %s322 = scalar_lea.vmem [#allocation7], %s321
          %323 = dma.done %s319, 32
        $region52: #{tpu_custom_call.1} parent=47 // pred_fallthru
          _
      $region48: #{tpu_custom_call.1} parent=5 // pred_fallthru
        _
    $region6: #{tpu_custom_call.1} parent=1 // loop_footer
      %s21 = sadd.s32 1, %s17
    $region7: #{tpu_custom_call.1} parent=1 // loop_footer_branch
      %16 = sbr.rel target = $region3
    $region8: #{tpu_custom_call.1} parent=1 // loop_exit
      _
    %324 = vsyncpa [#allocation3], 1
    %s325 = scalar_lea.sflag [#allocation3], 1
    %326 = vsyncpa %s325, 1
    %327 = vsyncpa [#allocation6], 1
    %s328 = scalar_lea.sflag [#allocation6], 1
    %329 = vsyncpa %s328, 1
    %330 = vsyncpa [#allocation4], 1
    %s331 = scalar_lea.sflag [#allocation4], 1
    %332 = vsyncpa %s331, 1

</llo_original>
